<compile_context>
chip_gen: v7x
topology: tpu7x:2x2x1
jax: 0.10.0
libtpu: 0.0.40
codegen_flags: <defaults>
</compile_context>

<pallas_src>
import functools

import jax
import jax.numpy as jnp
from jax.experimental import pallas as pl
from jax.experimental.pallas import tpu as pltpu

INPUT_DIM = 256
HIDDEN_DIMS = (128, 64)
TEMPERATURE = 1.0
EPS = 1e-5                      # torch.nn.LayerNorm default
OUT_LANES = 128                 # lane-dense output width (cols 0/1 used)
MAX_TILE_B = 1024               # max batch rows per grid step
SPLIT_THRESHOLD_B = 256         # force >=2 grid steps above this (v7x megacore)


def _cdiv(a, b):
    return -(-a // b)


def _round_up(x, m):
    return _cdiv(x, m) * m


def _dual_layernorm(h, half, left):
    """Affine-free per-branch LayerNorm on a [TB, 2*half] f32 tensor.

    Lanes [0, half) = anomaly branch, lanes [half, 2*half) = confidence
    branch.  Each half is normalized independently: one unmasked + one masked
    lane reduction per statistic (the other half derived by subtraction),
    and rsqrt is applied to the narrow [TB, 1] per-branch variances only.
    """
    inv_n = 1.0 / float(half)

    sum_t = jnp.sum(h, axis=-1, keepdims=True)                        # [TB,1]
    sum_l = jnp.sum(jnp.where(left, h, 0.0), axis=-1, keepdims=True)  # [TB,1]
    sum_r = sum_t - sum_l
    mu = jnp.where(left, sum_l, sum_r) * inv_n                        # [TB,2h]

    d = h - mu
    dsq = d * d
    var_t = jnp.sum(dsq, axis=-1, keepdims=True)
    var_l = jnp.sum(jnp.where(left, dsq, 0.0), axis=-1, keepdims=True)
    var_r = var_t - var_l

    inv_std_l = jax.lax.rsqrt(var_l * inv_n + EPS)                    # [TB,1]
    inv_std_r = jax.lax.rsqrt(var_r * inv_n + EPS)                    # [TB,1]
    return d * jnp.where(left, inv_std_l, inv_std_r)


def _fused_kernel(x_ref, w1_ref, w2_ref, w3_ref, vec_ref, out_ref, *, h1, h2):
    """Both branches of the head, fused along the lane dimension."""
    x = x_ref[...]                                   # bf16 [TB, 256]
    vec = vec_ref[...]                               # f32  [8, 256]
    b1 = vec[0:1, :]                                 # [1, 2*H1]
    b2 = vec[1:2, 0:2 * h2]                          # [1, 2*H2]
    b3 = vec[2:3, 0:OUT_LANES]                       # [1, 128]

    # lane masks: built once, reused for both LayerNorms
    left1 = jax.lax.broadcasted_iota(jnp.int32, (1, 2 * h1), 1) < h1
    left2 = jax.lax.broadcasted_iota(jnp.int32, (1, 2 * h2), 1) < h2

    # ---- layer 1: fused Linear (256 -> 2*H1) + ReLU + per-branch LayerNorm
    a = jnp.dot(x, w1_ref[...], preferred_element_type=jnp.float32) + b1
    a = jnp.maximum(a, 0.0)
    a = _dual_layernorm(a, h1, left1)                # f32 [TB, 2*H1]

    # ---- layer 2: block-diag Linear (2*H1 -> 2*H2) + ReLU + LayerNorm
    #      (gamma1 / beta1 already folded into w2 / b2)
    b = jnp.dot(a.astype(jnp.bfloat16), w2_ref[...],
                preferred_element_type=jnp.float32) + b2
    b = jnp.maximum(b, 0.0)
    b = _dual_layernorm(b, h2, left2)                # f32 [TB, 2*H2]

    # ---- output projection: padded [2*H2, 128] MXU matmul
    #      (gamma2 / beta2, output biases and 1/temperature already folded in)
    logits = jnp.dot(b.astype(jnp.bfloat16), w3_ref[...],
                     preferred_element_type=jnp.float32) + b3        # [TB,128]
    out_ref[...] = jax.nn.sigmoid(logits)


def prepare_fused_params(anomaly_params, confidence_params,
                         temperature=TEMPERATURE):
    """Fold / fuse both branches' parameters once; call outside the hot path.

    Each branch param list: [w1, b1, g1, be1, w2, b2, g2, be2, w3, b3] with
    weights stored as (in_dim, out_dim).
    Returns (w1f_bf16, w2f_bf16, w3pad_bf16, vec_f32).
    """
    w1a, b1a, g1a, be1a, w2a, b2a, g2a, be2a, w3a, b3a = anomaly_params
    w1c, b1c, g1c, be1c, w2c, b2c, g2c, be2c, w3c, b3c = confidence_params
    H1, H2 = HIDDEN_DIMS
    inv_temp = 1.0 / float(temperature)

    # layer 1: both branches side by side along the output (lane) dim
    w1f = jnp.concatenate([w1a, w1c], axis=1).astype(jnp.bfloat16)    # [256,256]
    b1f = jnp.concatenate([b1a, b1c])                                 # [256]

    # layer 2: gamma1 folded into rows of w2, beta1 @ w2 folded into b2,
    # branches packed block-diagonally
    w2f = jnp.zeros((2 * H1, 2 * H2), jnp.float32)
    w2f = w2f.at[:H1, :H2].set(g1a[:, None] * w2a)
    w2f = w2f.at[H1:, H2:].set(g1c[:, None] * w2c)
    w2f = w2f.astype(jnp.bfloat16)                                    # [256,128]
    b2f = jnp.concatenate([be1a @ w2a + b2a, be1c @ w2c + b2c])       # [128]

    # layer 3: gamma2 folded into w3, beta2 @ w3 + b3 folded into the bias,
    # 1/temperature folded into the anomaly column; padded to 128 lanes
    w3pad = jnp.zeros((2 * H2, OUT_LANES), jnp.float32)
    w3pad = w3pad.at[:H2, 0].set(g2a * w3a[:, 0] * inv_temp)
    w3pad = w3pad.at[H2:, 1].set(g2c * w3c[:, 0])
    w3pad = w3pad.astype(jnp.bfloat16)                                # [128,128]
    b3a_f = (be2a @ w3a[:, 0] + b3a[0]) * inv_temp
    b3c_f = be2c @ w3c[:, 0] + b3c[0]

    # pack remaining vectors into one lane-aligned [8, 256] f32 slab:
    # row 0 = b1f, row 1[:128] = b2f, row 2[0]/[1] = fused output biases
    vec = jnp.zeros((8, 2 * H1), jnp.float32)
    vec = vec.at[0, :].set(b1f)
    vec = vec.at[1, :2 * H2].set(b2f)
    vec = vec.at[2, 0].set(b3a_f)
    vec = vec.at[2, 1].set(b3c_f)
    return w1f, w2f, w3pad, vec


def _choose_tiling(batch):
    b16 = _round_up(max(batch, 1), 16)          # bf16 sublane multiple
    n_tiles = _cdiv(b16, MAX_TILE_B)
    if b16 >= SPLIT_THRESHOLD_B:
        n_tiles = max(n_tiles, 2)               # keep both v7x TCs busy
    tile_b = _round_up(_cdiv(b16, n_tiles), 16)
    n_tiles = _cdiv(b16, tile_b)
    return tile_b, tile_b * n_tiles


@jax.jit
def _fused_forward(features, w1f, w2f, w3pad, vec):
    batch = features.shape[0]
    tile_b, b_pad = _choose_tiling(batch)

    x = features.astype(jnp.bfloat16)
    if b_pad != batch:
        x = jnp.pad(x, ((0, b_pad - batch), (0, 0)))

    h1, h2 = HIDDEN_DIMS
    kernel = functools.partial(_fused_kernel, h1=h1, h2=h2)

    def resident(arr):                          # whole array VMEM-resident
        return pl.BlockSpec(arr.shape, lambda i: (0, 0))

    out = pl.pallas_call(
        kernel,
        out_shape=jax.ShapeDtypeStruct((b_pad, OUT_LANES), jnp.float32),
        grid=(b_pad // tile_b,),
        in_specs=[
            pl.BlockSpec((tile_b, INPUT_DIM), lambda i: (i, 0)),
            resident(w1f), resident(w2f), resident(w3pad), resident(vec),
        ],
        out_specs=pl.BlockSpec((tile_b, OUT_LANES), lambda i: (i, 0)),
        compiler_params=pltpu.CompilerParams(
            dimension_semantics=("parallel",)),
    )(x, w1f, w2f, w3pad, vec)

    return {"anomaly_score": out[:batch, 0], "confidence": out[:batch, 1]}


def anomaly_detection_head(features, anomaly_params, confidence_params,
                           temperature=TEMPERATURE):
    """Equivalent of AnomalyDetectionHead.forward; features: [B, input_dim].

    For repeated calls, use prepare_fused_params() once and call
    _fused_forward directly to avoid re-fusing the weights per call.
    """
    fused = prepare_fused_params(anomaly_params, confidence_params, temperature)
    return _fused_forward(features, *fused)


# ------------------------- parameter initialization -------------------------
def _init_branch(key, input_dim, hidden_dims):
    params = []
    dims = [input_dim] + list(hidden_dims)
    for i in range(len(hidden_dims)):
        key, kw, kb = jax.random.split(key, 3)
        bound = 1.0 / float(dims[i]) ** 0.5
        w = jax.random.uniform(kw, (dims[i], dims[i + 1]), jnp.float32, -bound, bound)
        b = jax.random.uniform(kb, (dims[i + 1],), jnp.float32, -bound, bound)
        gamma = jnp.ones((dims[i + 1],), jnp.float32)
        beta = jnp.zeros((dims[i + 1],), jnp.float32)
        params += [w, b, gamma, beta]
    key, kw, kb = jax.random.split(key, 3)
    bound = 1.0 / float(dims[-1]) ** 0.5
    w3 = jax.random.uniform(kw, (dims[-1], 1), jnp.float32, -bound, bound)
    b3 = jax.random.uniform(kb, (1,), jnp.float32, -bound, bound)
    params += [w3, b3]
    return params


# ----------------------------- pure-JAX reference ----------------------------
def _branch_ref(x, params, temperature):
    w1, b1, g1, be1, w2, b2, g2, be2, w3, b3 = params

    def ln(h, g, be):
        mu = jnp.mean(h, axis=-1, keepdims=True)
        var = jnp.mean((h - mu) ** 2, axis=-1, keepdims=True)
        return (h - mu) / jnp.sqrt(var + EPS) * g + be

    h = ln(jnp.maximum(x @ w1 + b1, 0.0), g1, be1)
    h = ln(jnp.maximum(h @ w2 + b2, 0.0), g2, be2)
    logits = (h @ w3)[:, 0] + b3
    return jax.nn.sigmoid(logits / temperature)


if __name__ == "__main__":
    key = jax.random.PRNGKey(0)
    k_x, k_a, k_c = jax.random.split(key, 3)

    B = 8
    features = jax.random.normal(k_x, (B, INPUT_DIM), jnp.float32)

    anomaly_params = _init_branch(k_a, INPUT_DIM, HIDDEN_DIMS)
    confidence_params = _init_branch(k_c, INPUT_DIM, HIDDEN_DIMS)

    # fuse/fold weights once (outside the per-call path), then run the kernel
    fused = prepare_fused_params(anomaly_params, confidence_params, TEMPERATURE)
    out = _fused_forward(features, *fused)
    out = jax.tree_util.tree_map(jax.block_until_ready, out)

    # correctness check against a pure-f32 JAX reference
    ref_anom = _branch_ref(features, anomaly_params, TEMPERATURE)
    ref_conf = _branch_ref(features, confidence_params, 1.0)
    assert out["anomaly_score"].shape == (B,)
    assert out["confidence"].shape == (B,)
    # bf16 MXU operands -> tolerance relaxed vs the pure-f32 reference
    assert jnp.allclose(out["anomaly_score"], ref_anom, atol=2e-2, rtol=2e-2)
    assert jnp.allclose(out["confidence"], ref_conf, atol=2e-2, rtol=2e-2)

    print("KERNEL_OK")
</pallas_src>

<mosaic_0001>
module attributes {stable_mosaic.version = 11 : i64} {
  func.func @_fused_kernel(%arg0: i32, %arg1: memref<16x256xbf16, #tpu.memory_space<vmem>>, %arg2: memref<256x256xbf16, #tpu.memory_space<vmem>>, %arg3: memref<256x128xbf16, #tpu.memory_space<vmem>>, %arg4: memref<128x128xbf16, #tpu.memory_space<vmem>>, %arg5: memref<8x256xf32, #tpu.memory_space<vmem>>, %arg6: memref<16x128xf32, #tpu.memory_space<vmem>>) attributes {dimension_semantics = [#tpu.dimension_semantics<parallel>], iteration_bounds = array<i64: 1>, scalar_prefetch = 0 : i64, scratch_operands = 0 : i64, tpu.core_type = #tpu.core_type<tc>, window_params = [{transform_indices = @transform_0, window_bounds = array<i64: 16, 256>}, {pipeline_mode = #tpu.pipeline_mode<synchronous>, transform_indices = @transform_1, window_bounds = array<i64: 256, 256>}, {pipeline_mode = #tpu.pipeline_mode<synchronous>, transform_indices = @transform_2, window_bounds = array<i64: 256, 128>}, {pipeline_mode = #tpu.pipeline_mode<synchronous>, transform_indices = @transform_3, window_bounds = array<i64: 128, 128>}, {pipeline_mode = #tpu.pipeline_mode<synchronous>, transform_indices = @transform_4, window_bounds = array<i64: 8, 256>}, {transform_indices = @transform_5, window_bounds = array<i64: 16, 128>}]} {
    %c0 = arith.constant 0 : index
    %c0_0 = arith.constant 0 : index
    %0 = vector.load %arg1[%c0, %c0_0] : memref<16x256xbf16, #tpu.memory_space<vmem>>, vector<16x256xbf16>
    %c0_1 = arith.constant 0 : index
    %c0_2 = arith.constant 0 : index
    %1 = vector.load %arg5[%c0_1, %c0_2] : memref<8x256xf32, #tpu.memory_space<vmem>>, vector<8x256xf32>
    %2 = vector.extract_strided_slice %1 {offsets = [0, 0], sizes = [1, 256], strides = [1, 1]} : vector<8x256xf32> to vector<1x256xf32>
    %3 = vector.extract_strided_slice %1 {offsets = [1, 0], sizes = [1, 128], strides = [1, 1]} : vector<8x256xf32> to vector<1x128xf32>
    %4 = vector.extract_strided_slice %1 {offsets = [2, 0], sizes = [1, 128], strides = [1, 1]} : vector<8x256xf32> to vector<1x128xf32>
    %5 = tpu.iota {dimensions = array<i32: 1>} : vector<1x256xi32>
    %c128_i32 = arith.constant 128 : i32
    %6 = vector.broadcast %c128_i32 : i32 to vector<1x256xi32>
    %7 = arith.cmpi slt, %5, %6 : vector<1x256xi32>
    %8 = tpu.iota {dimensions = array<i32: 1>} : vector<1x128xi32>
    %c64_i32 = arith.constant 64 : i32
    %9 = vector.broadcast %c64_i32 : i32 to vector<1x128xi32>
    %10 = arith.cmpi slt, %8, %9 : vector<1x128xi32>
    %c0_3 = arith.constant 0 : index
    %c0_4 = arith.constant 0 : index
    %11 = vector.load %arg2[%c0_3, %c0_4] : memref<256x256xbf16, #tpu.memory_space<vmem>>, vector<256x256xbf16>
    %cst = arith.constant dense<0.000000e+00> : vector<16x256xf32>
    %12 = tpu.matmul %0, %11, %cst {dimension_numbers = #tpu.dot_dimension_numbers<[1], [0], [0], [1], [0, 0, 1, 1], [], []>} : vector<16x256xbf16>, vector<256x256xbf16>, vector<16x256xf32> -> vector<16x256xf32>
    %13 = vector.broadcast %2 : vector<1x256xf32> to vector<16x256xf32>
    %14 = arith.addf %12, %13 : vector<16x256xf32>
    %cst_5 = arith.constant 0.000000e+00 : f32
    %15 = vector.broadcast %cst_5 : f32 to vector<16x256xf32>
    %16 = arith.maximumf %14, %15 : vector<16x256xf32>
    %cst_6 = arith.constant dense<0.000000e+00> : vector<16xf32>
    %17 = vector.multi_reduction <add>, %16, %cst_6 [1] : vector<16x256xf32> to vector<16xf32>
    %18 = vector.shape_cast %17 : vector<16xf32> to vector<16x1xf32>
    %cst_7 = arith.constant 0.000000e+00 : f32
    %19 = vector.shape_cast %7 : vector<1x256xi1> to vector<1x256xi1>
    %20 = vector.broadcast %19 : vector<1x256xi1> to vector<16x256xi1>
    %21 = vector.broadcast %cst_7 : f32 to vector<16x256xf32>
    %22 = arith.select %20, %16, %21 : vector<16x256xi1>, vector<16x256xf32>
    %cst_8 = arith.constant dense<0.000000e+00> : vector<16xf32>
    %23 = vector.multi_reduction <add>, %22, %cst_8 [1] : vector<16x256xf32> to vector<16xf32>
    %24 = vector.shape_cast %23 : vector<16xf32> to vector<16x1xf32>
    %25 = arith.subf %18, %24 : vector<16x1xf32>
    %26 = vector.shape_cast %7 : vector<1x256xi1> to vector<1x256xi1>
    %27 = vector.broadcast %26 : vector<1x256xi1> to vector<16x256xi1>
    %28 = vector.shape_cast %24 : vector<16x1xf32> to vector<16x1xf32>
    %29 = vector.broadcast %28 : vector<16x1xf32> to vector<16x256xf32>
    %30 = vector.shape_cast %25 : vector<16x1xf32> to vector<16x1xf32>
    %31 = vector.broadcast %30 : vector<16x1xf32> to vector<16x256xf32>
    %32 = arith.select %27, %29, %31 : vector<16x256xi1>, vector<16x256xf32>
    %cst_9 = arith.constant 7.812500e-03 : f32
    %33 = vector.broadcast %cst_9 : f32 to vector<16x256xf32>
    %34 = arith.mulf %32, %33 : vector<16x256xf32>
    %35 = arith.subf %16, %34 : vector<16x256xf32>
    %36 = arith.mulf %35, %35 : vector<16x256xf32>
    %cst_10 = arith.constant dense<0.000000e+00> : vector<16xf32>
    %37 = vector.multi_reduction <add>, %36, %cst_10 [1] : vector<16x256xf32> to vector<16xf32>
    %38 = vector.shape_cast %37 : vector<16xf32> to vector<16x1xf32>
    %cst_11 = arith.constant 0.000000e+00 : f32
    %39 = vector.shape_cast %7 : vector<1x256xi1> to vector<1x256xi1>
    %40 = vector.broadcast %39 : vector<1x256xi1> to vector<16x256xi1>
    %41 = vector.broadcast %cst_11 : f32 to vector<16x256xf32>
    %42 = arith.select %40, %36, %41 : vector<16x256xi1>, vector<16x256xf32>
    %cst_12 = arith.constant dense<0.000000e+00> : vector<16xf32>
    %43 = vector.multi_reduction <add>, %42, %cst_12 [1] : vector<16x256xf32> to vector<16xf32>
    %44 = vector.shape_cast %43 : vector<16xf32> to vector<16x1xf32>
    %45 = arith.subf %38, %44 : vector<16x1xf32>
    %cst_13 = arith.constant 7.812500e-03 : f32
    %46 = vector.broadcast %cst_13 : f32 to vector<16x1xf32>
    %47 = arith.mulf %44, %46 : vector<16x1xf32>
    %cst_14 = arith.constant 9.99999974E-6 : f32
    %48 = vector.broadcast %cst_14 : f32 to vector<16x1xf32>
    %49 = arith.addf %47, %48 : vector<16x1xf32>
    %50 = math.rsqrt %49 : vector<16x1xf32>
    %cst_15 = arith.constant 7.812500e-03 : f32
    %51 = vector.broadcast %cst_15 : f32 to vector<16x1xf32>
    %52 = arith.mulf %45, %51 : vector<16x1xf32>
    %cst_16 = arith.constant 9.99999974E-6 : f32
    %53 = vector.broadcast %cst_16 : f32 to vector<16x1xf32>
    %54 = arith.addf %52, %53 : vector<16x1xf32>
    %55 = math.rsqrt %54 : vector<16x1xf32>
    %56 = vector.shape_cast %7 : vector<1x256xi1> to vector<1x256xi1>
    %57 = vector.broadcast %56 : vector<1x256xi1> to vector<16x256xi1>
    %58 = vector.shape_cast %50 : vector<16x1xf32> to vector<16x1xf32>
    %59 = vector.broadcast %58 : vector<16x1xf32> to vector<16x256xf32>
    %60 = vector.shape_cast %55 : vector<16x1xf32> to vector<16x1xf32>
    %61 = vector.broadcast %60 : vector<16x1xf32> to vector<16x256xf32>
    %62 = arith.select %57, %59, %61 : vector<16x256xi1>, vector<16x256xf32>
    %63 = arith.mulf %35, %62 : vector<16x256xf32>
    %64 = arith.truncf %63 : vector<16x256xf32> to vector<16x256xbf16>
    %c0_17 = arith.constant 0 : index
    %c0_18 = arith.constant 0 : index
    %65 = vector.load %arg3[%c0_17, %c0_18] : memref<256x128xbf16, #tpu.memory_space<vmem>>, vector<256x128xbf16>
    %cst_19 = arith.constant dense<0.000000e+00> : vector<16x128xf32>
    %66 = tpu.matmul %64, %65, %cst_19 {dimension_numbers = #tpu.dot_dimension_numbers<[1], [0], [0], [1], [0, 0, 1, 1], [], []>} : vector<16x256xbf16>, vector<256x128xbf16>, vector<16x128xf32> -> vector<16x128xf32>
    %67 = vector.broadcast %3 : vector<1x128xf32> to vector<16x128xf32>
    %68 = arith.addf %66, %67 : vector<16x128xf32>
    %cst_20 = arith.constant 0.000000e+00 : f32
    %69 = vector.broadcast %cst_20 : f32 to vector<16x128xf32>
    %70 = arith.maximumf %68, %69 : vector<16x128xf32>
    %cst_21 = arith.constant dense<0.000000e+00> : vector<16xf32>
    %71 = vector.multi_reduction <add>, %70, %cst_21 [1] : vector<16x128xf32> to vector<16xf32>
    %72 = vector.shape_cast %71 : vector<16xf32> to vector<16x1xf32>
    %cst_22 = arith.constant 0.000000e+00 : f32
    %73 = vector.shape_cast %10 : vector<1x128xi1> to vector<1x128xi1>
    %74 = vector.broadcast %73 : vector<1x128xi1> to vector<16x128xi1>
    %75 = vector.broadcast %cst_22 : f32 to vector<16x128xf32>
    %76 = arith.select %74, %70, %75 : vector<16x128xi1>, vector<16x128xf32>
    %cst_23 = arith.constant dense<0.000000e+00> : vector<16xf32>
    %77 = vector.multi_reduction <add>, %76, %cst_23 [1] : vector<16x128xf32> to vector<16xf32>
    %78 = vector.shape_cast %77 : vector<16xf32> to vector<16x1xf32>
    %79 = arith.subf %72, %78 : vector<16x1xf32>
    %80 = vector.shape_cast %10 : vector<1x128xi1> to vector<1x128xi1>
    %81 = vector.broadcast %80 : vector<1x128xi1> to vector<16x128xi1>
    %82 = vector.shape_cast %78 : vector<16x1xf32> to vector<16x1xf32>
    %83 = vector.broadcast %82 : vector<16x1xf32> to vector<16x128xf32>
    %84 = vector.shape_cast %79 : vector<16x1xf32> to vector<16x1xf32>
    %85 = vector.broadcast %84 : vector<16x1xf32> to vector<16x128xf32>
    %86 = arith.select %81, %83, %85 : vector<16x128xi1>, vector<16x128xf32>
    %cst_24 = arith.constant 1.562500e-02 : f32
    %87 = vector.broadcast %cst_24 : f32 to vector<16x128xf32>
    %88 = arith.mulf %86, %87 : vector<16x128xf32>
    %89 = arith.subf %70, %88 : vector<16x128xf32>
    %90 = arith.mulf %89, %89 : vector<16x128xf32>
    %cst_25 = arith.constant dense<0.000000e+00> : vector<16xf32>
    %91 = vector.multi_reduction <add>, %90, %cst_25 [1] : vector<16x128xf32> to vector<16xf32>
    %92 = vector.shape_cast %91 : vector<16xf32> to vector<16x1xf32>
    %cst_26 = arith.constant 0.000000e+00 : f32
    %93 = vector.shape_cast %10 : vector<1x128xi1> to vector<1x128xi1>
    %94 = vector.broadcast %93 : vector<1x128xi1> to vector<16x128xi1>
    %95 = vector.broadcast %cst_26 : f32 to vector<16x128xf32>
    %96 = arith.select %94, %90, %95 : vector<16x128xi1>, vector<16x128xf32>
    %cst_27 = arith.constant dense<0.000000e+00> : vector<16xf32>
    %97 = vector.multi_reduction <add>, %96, %cst_27 [1] : vector<16x128xf32> to vector<16xf32>
    %98 = vector.shape_cast %97 : vector<16xf32> to vector<16x1xf32>
    %99 = arith.subf %92, %98 : vector<16x1xf32>
    %cst_28 = arith.constant 1.562500e-02 : f32
    %100 = vector.broadcast %cst_28 : f32 to vector<16x1xf32>
    %101 = arith.mulf %98, %100 : vector<16x1xf32>
    %cst_29 = arith.constant 9.99999974E-6 : f32
    %102 = vector.broadcast %cst_29 : f32 to vector<16x1xf32>
    %103 = arith.addf %101, %102 : vector<16x1xf32>
    %104 = math.rsqrt %103 : vector<16x1xf32>
    %cst_30 = arith.constant 1.562500e-02 : f32
    %105 = vector.broadcast %cst_30 : f32 to vector<16x1xf32>
    %106 = arith.mulf %99, %105 : vector<16x1xf32>
    %cst_31 = arith.constant 9.99999974E-6 : f32
    %107 = vector.broadcast %cst_31 : f32 to vector<16x1xf32>
    %108 = arith.addf %106, %107 : vector<16x1xf32>
    %109 = math.rsqrt %108 : vector<16x1xf32>
    %110 = vector.shape_cast %10 : vector<1x128xi1> to vector<1x128xi1>
    %111 = vector.broadcast %110 : vector<1x128xi1> to vector<16x128xi1>
    %112 = vector.shape_cast %104 : vector<16x1xf32> to vector<16x1xf32>
    %113 = vector.broadcast %112 : vector<16x1xf32> to vector<16x128xf32>
    %114 = vector.shape_cast %109 : vector<16x1xf32> to vector<16x1xf32>
    %115 = vector.broadcast %114 : vector<16x1xf32> to vector<16x128xf32>
    %116 = arith.select %111, %113, %115 : vector<16x128xi1>, vector<16x128xf32>
    %117 = arith.mulf %89, %116 : vector<16x128xf32>
    %118 = arith.truncf %117 : vector<16x128xf32> to vector<16x128xbf16>
    %c0_32 = arith.constant 0 : index
    %c0_33 = arith.constant 0 : index
    %119 = vector.load %arg4[%c0_32, %c0_33] : memref<128x128xbf16, #tpu.memory_space<vmem>>, vector<128x128xbf16>
    %cst_34 = arith.constant dense<0.000000e+00> : vector<16x128xf32>
    %120 = tpu.matmul %118, %119, %cst_34 {dimension_numbers = #tpu.dot_dimension_numbers<[1], [0], [0], [1], [0, 0, 1, 1], [], []>} : vector<16x128xbf16>, vector<128x128xbf16>, vector<16x128xf32> -> vector<16x128xf32>
    %121 = vector.broadcast %4 : vector<1x128xf32> to vector<16x128xf32>
    %122 = arith.addf %120, %121 : vector<16x128xf32>
    %123 = arith.negf %122 : vector<16x128xf32>
    %124 = math.exp %123 : vector<16x128xf32>
    %cst_35 = arith.constant 1.000000e+00 : f32
    %125 = vector.broadcast %cst_35 : f32 to vector<16x128xf32>
    %126 = arith.addf %125, %124 : vector<16x128xf32>
    %127 = arith.divf %125, %126 : vector<16x128xf32>
    %c0_36 = arith.constant 0 : index
    %c0_37 = arith.constant 0 : index
    %128 = vector.load %arg6[%c0_36, %c0_37] : memref<16x128xf32, #tpu.memory_space<vmem>>, vector<16x128xf32>
    tpu.vector_store %arg6[%c0_36, %c0_37], %127 {strides = array<i32>} : memref<16x128xf32, #tpu.memory_space<vmem>>, vector<16x128xf32>,
    return
  }
  func.func @transform_0(%arg0: i32) -> (i32, i32) {
    %c0_i32 = arith.constant 0 : i32
    %c0_i32_0 = arith.constant 0 : i32
    return %arg0, %c0_i32 : i32, i32
  }
  func.func @transform_1(%arg0: i32) -> (i32, i32) {
    %c0_i32 = arith.constant 0 : i32
    %c0_i32_0 = arith.constant 0 : i32
    %c0_i32_1 = arith.constant 0 : i32
    return %c0_i32, %c0_i32_0 : i32, i32
  }
  func.func @transform_2(%arg0: i32) -> (i32, i32) {
    %c0_i32 = arith.constant 0 : i32
    %c0_i32_0 = arith.constant 0 : i32
    %c0_i32_1 = arith.constant 0 : i32
    return %c0_i32, %c0_i32_0 : i32, i32
  }
  func.func @transform_3(%arg0: i32) -> (i32, i32) {
    %c0_i32 = arith.constant 0 : i32
    %c0_i32_0 = arith.constant 0 : i32
    %c0_i32_1 = arith.constant 0 : i32
    return %c0_i32, %c0_i32_0 : i32, i32
  }
  func.func @transform_4(%arg0: i32) -> (i32, i32) {
    %c0_i32 = arith.constant 0 : i32
    %c0_i32_0 = arith.constant 0 : i32
    %c0_i32_1 = arith.constant 0 : i32
    return %c0_i32, %c0_i32_0 : i32, i32
  }
  func.func @transform_5(%arg0: i32) -> (i32, i32) {
    %c0_i32 = arith.constant 0 : i32
    %c0_i32_0 = arith.constant 0 : i32
    return %arg0, %c0_i32 : i32, i32
  }
}

</mosaic_0001>

<llo_original>
// kernel: _fused_forward.1
$region0: #{_fused_forward.1}
  #allocation0 [shape = 'u32[]', space=smem, size = 0x4, offset = 0x4, fixed_abs, tag = 'smem constant byte address 0x4 - core index']
  #allocation1 [shape = 'u32[144,128]{1,0:T(1,128)}', space=vmem, size = 0x12000, scoped, tag = 'internal scratch']
  %s0 = inlined_call_operand.vmem [shape: bf16[16,256], index: 0, kind: input, shape index: {}]
  %s1 = inlined_call_operand.hbm [shape: bf16[256,256], index: 1, kind: input, shape index: {}]
  %s2 = inlined_call_operand.hbm [shape: bf16[256,128], index: 2, kind: input, shape index: {}]
  %s3 = inlined_call_operand.hbm [shape: bf16[128,128], index: 3, kind: input, shape index: {}]
  %s4 = inlined_call_operand.vmem [shape: f32[8,256], index: 4, kind: input, shape index: {}]
  %s5 = inlined_call_operand.vmem [shape: f32[16,128], index: 5, kind: output, shape index: {}]
  %s6 = sld [smem:[#allocation0]]
  $region42: #{_fused_forward.1} parent=0
    _
  %s8 = ssub.s32 1, %s6
  %s9 = scalar_select 0, %s8, %s6
  $region1: #{_fused_forward.1} parent=0
    #allocation2 [shape = 'u8[131072]{0}', space=vmem, size = 0x20000, scoped, tag = 'input window, operand 1, single buffered']
    #allocation3 [shape = 's32[1]{0}', space=sflag, size = 0x4, scoped, tag = 'scoped memory for _fused_forward.1']
    #allocation4 [shape = 'u8[65536]{0}', space=vmem, size = 0x10000, scoped, tag = 'input window, operand 2, single buffered']
    #allocation5 [shape = 's32[1]{0}', space=sflag, size = 0x4, scoped, tag = 'scoped memory for _fused_forward.1']
    #allocation6 [shape = 'u8[32768]{0}', space=vmem, size = 0x8000, scoped, tag = 'input window, operand 3, single buffered']
    %10 = vsyncpa [#allocation3], 0
    %11 = vsyncpa [#allocation5], 0
    // Predicated region
    $region2: #{_fused_forward.1} parent=1 // pred_check
      _
    $region3: #{_fused_forward.1} parent=1 // pred_check_branch
      %13 = sbr.rel (0) target = $region5
    $region4: #{_fused_forward.1} parent=1 // pred_region
      _
    $region5: #{_fused_forward.1} parent=1 // pred_fallthru
      _
    // Predicated region
    $region6: #{_fused_forward.1} parent=1 // pred_check
      _
    $region7: #{_fused_forward.1} parent=1 // pred_check_branch
      %15 = sbr.rel (0) target = $region9
    $region8: #{_fused_forward.1} parent=1 // pred_region
      %s17 = ssub.s32 4096, 4096
      %18 = vsyncadd [#allocation3], %s17
      %s19 = sshll.u32 [#allocation2], 4
      %s20 = int_to_ptr.vmem [resolvable:$true] %s19
      %25 = dma.hbm_to_vmem [thread:$0]  %s1, 4096, %s20, [#allocation3], 128, 128, 8
    $region9: #{_fused_forward.1} parent=1 // pred_fallthru
      _
    // Predicated region
    $region10: #{_fused_forward.1} parent=1 // pred_check
      _
    $region11: #{_fused_forward.1} parent=1 // pred_check_branch
      %27 = sbr.rel (0) target = $region13
    $region12: #{_fused_forward.1} parent=1 // pred_region
      %s29 = ssub.s32 2048, 2048
      %30 = vsyncadd [#allocation5], %s29
      %s31 = sshll.u32 [#allocation4], 4
      %s32 = int_to_ptr.vmem [resolvable:$true] %s31
      %37 = dma.hbm_to_vmem [thread:$0]  %s2, 2048, %s32, [#allocation5], 64, 64, 4
    $region13: #{_fused_forward.1} parent=1 // pred_fallthru
      _
    // Predicated region
    $region14: #{_fused_forward.1} parent=1 // pred_check
      _
    $region15: #{_fused_forward.1} parent=1 // pred_check_branch
      %39 = sbr.rel (0) target = $region17
    $region16: #{_fused_forward.1} parent=1 // pred_region
      %s41 = ssub.s32 1024, 1024
      %42 = vsyncadd [#allocation5], %s41
      %s43 = sshll.u32 [#allocation6], 4
      %s44 = int_to_ptr.vmem [resolvable:$true] %s43
      %49 = dma.hbm_to_vmem [thread:$0]  %s3, 1024, %s44, [#allocation5], 64, 64, 4
    $region17: #{_fused_forward.1} parent=1 // pred_fallthru
      _
    // Predicated region
    $region18: #{_fused_forward.1} parent=1 // pred_check
      _
    $region19: #{_fused_forward.1} parent=1 // pred_check_branch
      %51 = sbr.rel (0) target = $region21
    $region20: #{_fused_forward.1} parent=1 // pred_region
      _
    $region21: #{_fused_forward.1} parent=1 // pred_fallthru
      _
    // Predicated region
    $region22: #{_fused_forward.1} parent=1 // pred_check
      _
    $region23: #{_fused_forward.1} parent=1 // pred_check_branch
      %53 = sbr.rel (0) target = $region25
    $region24: #{_fused_forward.1} parent=1 // pred_region
      %54 = dma.done [#allocation3], 4096
    $region25: #{_fused_forward.1} parent=1 // pred_fallthru
      _
    // Predicated region
    $region26: #{_fused_forward.1} parent=1 // pred_check
      _
    $region27: #{_fused_forward.1} parent=1 // pred_check_branch
      %56 = sbr.rel (0) target = $region29
    $region28: #{_fused_forward.1} parent=1 // pred_region
      %57 = dma.done [#allocation5], 2048
    $region29: #{_fused_forward.1} parent=1 // pred_fallthru
      _
    // Predicated region
    $region30: #{_fused_forward.1} parent=1 // pred_check
      _
    $region31: #{_fused_forward.1} parent=1 // pred_check_branch
      %59 = sbr.rel (0) target = $region33
    $region32: #{_fused_forward.1} parent=1 // pred_region
      %60 = dma.done [#allocation5], 1024
    $region33: #{_fused_forward.1} parent=1 // pred_fallthru
      _
    %v62 = vld [vmem:[%s0] sm:$0xff]
    %v63 = vld [vmem:[%s0 + $0x8] sm:$0xff]
    %v64 = vld [vmem:[%s4] sm:$0xff]
    %v65 = vld [vmem:[%s4 + $0x8] sm:$0xff]
    %v66 = vlaneseq
    %v67 = vand.u32 %v66, 127
    %v68 = vadd.s32 %v67, 128
    %vm69 = vcmp.lt.s32.totalorder %v67, 128
    %vm70 = vcmp.lt.s32.totalorder %v68, 128
    %vm71 = vcmp.lt.s32.totalorder %v67, 64
    %v72 = vld [vmem:[#allocation2] sm:$0xff]
    %v73 = vld [vmem:[#allocation2 + $0x8] sm:$0xff]
    %v74 = vld [vmem:[#allocation2 + $0x10] sm:$0xff]
    %v75 = vld [vmem:[#allocation2 + $0x18] sm:$0xff]
    %v76 = vld [vmem:[#allocation2 + $0x20] sm:$0xff]
    %v77 = vld [vmem:[#allocation2 + $0x28] sm:$0xff]
    %v78 = vld [vmem:[#allocation2 + $0x30] sm:$0xff]
    %v79 = vld [vmem:[#allocation2 + $0x38] sm:$0xff]
    %v80 = vld [vmem:[#allocation2 + $0x40] sm:$0xff]
    %v81 = vld [vmem:[#allocation2 + $0x48] sm:$0xff]
    %v82 = vld [vmem:[#allocation2 + $0x50] sm:$0xff]
    %v83 = vld [vmem:[#allocation2 + $0x58] sm:$0xff]
    %v84 = vld [vmem:[#allocation2 + $0x60] sm:$0xff]
    %v85 = vld [vmem:[#allocation2 + $0x68] sm:$0xff]
    %v86 = vld [vmem:[#allocation2 + $0x70] sm:$0xff]
    %v87 = vld [vmem:[#allocation2 + $0x78] sm:$0xff]
    %v88 = vld [vmem:[#allocation2 + $0x80] sm:$0xff]
    %v89 = vld [vmem:[#allocation2 + $0x88] sm:$0xff]
    %v90 = vld [vmem:[#allocation2 + $0x90] sm:$0xff]
    %v91 = vld [vmem:[#allocation2 + $0x98] sm:$0xff]
    %v92 = vld [vmem:[#allocation2 + $0xa0] sm:$0xff]
    %v93 = vld [vmem:[#allocation2 + $0xa8] sm:$0xff]
    %v94 = vld [vmem:[#allocation2 + $0xb0] sm:$0xff]
    %v95 = vld [vmem:[#allocation2 + $0xb8] sm:$0xff]
    %v96 = vld [vmem:[#allocation2 + $0xc0] sm:$0xff]
    %v97 = vld [vmem:[#allocation2 + $0xc8] sm:$0xff]
    %v98 = vld [vmem:[#allocation2 + $0xd0] sm:$0xff]
    %v99 = vld [vmem:[#allocation2 + $0xd8] sm:$0xff]
    %v100 = vld [vmem:[#allocation2 + $0xe0] sm:$0xff]
    %v101 = vld [vmem:[#allocation2 + $0xe8] sm:$0xff]
    %v102 = vld [vmem:[#allocation2 + $0xf0] sm:$0xff]
    %v103 = vld [vmem:[#allocation2 + $0xf8] sm:$0xff]
    %v104 = vlaneseq
    %v105 = vshrl.u32 %v104, 7
    %v106 = vsub.s32 0, %v105
    %v107 = vrot.slane %v64, %v106
    %v108 = vlaneseq
    %v109 = vshrl.u32 %v108, 7
    %v110 = vsub.s32 0, %v109
    %v111 = vrot.slane %v65, %v110
    %v114 = vunpack.c.l.b16 %v62
    %v115 = vunpack.c.h.b16 %v62
    %v116 = vunpack.c.l.b16 %v63
    %v117 = vunpack.c.h.b16 %v63
    %v118 = vpack.c.b16 %v116, %v114
    %v119 = vpack.c.b16 %v117, %v115
    %v154 = vunpack.c.l.b16 %v72
    %v155 = vunpack.c.h.b16 %v72
    %v156 = vunpack.c.l.b16 %v73
    %v157 = vunpack.c.h.b16 %v73
    %v158 = vunpack.c.l.b16 %v74
    %v159 = vunpack.c.h.b16 %v74
    %v160 = vunpack.c.l.b16 %v75
    %v161 = vunpack.c.h.b16 %v75
    %v162 = vunpack.c.l.b16 %v76
    %v163 = vunpack.c.h.b16 %v76
    %v164 = vunpack.c.l.b16 %v77
    %v165 = vunpack.c.h.b16 %v77
    %v166 = vunpack.c.l.b16 %v78
    %v167 = vunpack.c.h.b16 %v78
    %v168 = vunpack.c.l.b16 %v79
    %v169 = vunpack.c.h.b16 %v79
    %v170 = vunpack.c.l.b16 %v80
    %v171 = vunpack.c.h.b16 %v80
    %v172 = vunpack.c.l.b16 %v81
    %v173 = vunpack.c.h.b16 %v81
    %v174 = vunpack.c.l.b16 %v82
    %v175 = vunpack.c.h.b16 %v82
    %v176 = vunpack.c.l.b16 %v83
    %v177 = vunpack.c.h.b16 %v83
    %v178 = vunpack.c.l.b16 %v84
    %v179 = vunpack.c.h.b16 %v84
    %v180 = vunpack.c.l.b16 %v85
    %v181 = vunpack.c.h.b16 %v85
    %v182 = vunpack.c.l.b16 %v86
    %v183 = vunpack.c.h.b16 %v86
    %v184 = vunpack.c.l.b16 %v87
    %v185 = vunpack.c.h.b16 %v87
    %v186 = vunpack.c.l.b16 %v88
    %v187 = vunpack.c.h.b16 %v88
    %v188 = vunpack.c.l.b16 %v89
    %v189 = vunpack.c.h.b16 %v89
    %v190 = vunpack.c.l.b16 %v90
    %v191 = vunpack.c.h.b16 %v90
    %v192 = vunpack.c.l.b16 %v91
    %v193 = vunpack.c.h.b16 %v91
    %v194 = vunpack.c.l.b16 %v92
    %v195 = vunpack.c.h.b16 %v92
    %v196 = vunpack.c.l.b16 %v93
    %v197 = vunpack.c.h.b16 %v93
    %v198 = vunpack.c.l.b16 %v94
    %v199 = vunpack.c.h.b16 %v94
    %v200 = vunpack.c.l.b16 %v95
    %v201 = vunpack.c.h.b16 %v95
    %v202 = vunpack.c.l.b16 %v96
    %v203 = vunpack.c.h.b16 %v96
    %v204 = vunpack.c.l.b16 %v97
    %v205 = vunpack.c.h.b16 %v97
    %v206 = vunpack.c.l.b16 %v98
    %v207 = vunpack.c.h.b16 %v98
    %v208 = vunpack.c.l.b16 %v99
    %v209 = vunpack.c.h.b16 %v99
    %v210 = vunpack.c.l.b16 %v100
    %v211 = vunpack.c.h.b16 %v100
    %v212 = vunpack.c.l.b16 %v101
    %v213 = vunpack.c.h.b16 %v101
    %v214 = vunpack.c.l.b16 %v102
    %v215 = vunpack.c.h.b16 %v102
    %v216 = vunpack.c.l.b16 %v103
    %v217 = vunpack.c.h.b16 %v103
    %v218 = vpack.c.b16 %v156, %v154
    %v219 = vpack.c.b16 %v157, %v155
    %v220 = vpack.c.b16 %v160, %v158
    %v221 = vpack.c.b16 %v161, %v159
    %v222 = vpack.c.b16 %v164, %v162
    %v223 = vpack.c.b16 %v165, %v163
    %v224 = vpack.c.b16 %v168, %v166
    %v225 = vpack.c.b16 %v169, %v167
    %v226 = vpack.c.b16 %v172, %v170
    %v227 = vpack.c.b16 %v173, %v171
    %v228 = vpack.c.b16 %v176, %v174
    %v229 = vpack.c.b16 %v177, %v175
    %v230 = vpack.c.b16 %v180, %v178
    %v231 = vpack.c.b16 %v181, %v179
    %v232 = vpack.c.b16 %v184, %v182
    %v233 = vpack.c.b16 %v185, %v183
    %v234 = vpack.c.b16 %v188, %v186
    %v235 = vpack.c.b16 %v189, %v187
    %v236 = vpack.c.b16 %v192, %v190
    %v237 = vpack.c.b16 %v193, %v191
    %v238 = vpack.c.b16 %v196, %v194
    %v239 = vpack.c.b16 %v197, %v195
    %v240 = vpack.c.b16 %v200, %v198
    %v241 = vpack.c.b16 %v201, %v199
    %v242 = vpack.c.b16 %v204, %v202
    %v243 = vpack.c.b16 %v205, %v203
    %v244 = vpack.c.b16 %v208, %v206
    %v245 = vpack.c.b16 %v209, %v207
    %v246 = vpack.c.b16 %v212, %v210
    %v247 = vpack.c.b16 %v213, %v211
    %v248 = vpack.c.b16 %v216, %v214
    %v249 = vpack.c.b16 %v217, %v215
    %282 = vmatprep.subr.bf16.mxu0 %v219
    %283 = vmatpush1.bf16.msra.mxu0 %v218
    %284 = vmatprep.subr.bf16.mxu0 %v221
    %285 = vmatpush1.bf16.msra.mxu0 %v220
    %286 = vmatprep.subr.bf16.mxu0 %v223
    %287 = vmatpush1.bf16.msra.mxu0 %v222
    %288 = vmatprep.subr.bf16.mxu0 %v225
    %289 = vmatpush1.bf16.msra.mxu0 %v224
    %290 = vmatprep.subr.bf16.mxu0 %v227
    %291 = vmatpush1.bf16.msra.mxu0 %v226
    %292 = vmatprep.subr.bf16.mxu0 %v229
    %293 = vmatpush1.bf16.msra.mxu0 %v228
    %294 = vmatprep.subr.bf16.mxu0 %v231
    %295 = vmatpush1.bf16.msra.mxu0 %v230
    %296 = vmatprep.subr.bf16.mxu0 %v233
    %297 = vmatpush1.bf16.msra.mxu0 %v232
    %298 = vmatprep.subr.bf16.mxu0 %v235
    %299 = vmatpush1.bf16.msra.mxu0 %v234
    %300 = vmatprep.subr.bf16.mxu0 %v237
    %301 = vmatpush1.bf16.msra.mxu0 %v236
    %302 = vmatprep.subr.bf16.mxu0 %v239
    %303 = vmatpush1.bf16.msra.mxu0 %v238
    %304 = vmatprep.subr.bf16.mxu0 %v241
    %305 = vmatpush1.bf16.msra.mxu0 %v240
    %306 = vmatprep.subr.bf16.mxu0 %v243
    %307 = vmatpush1.bf16.msra.mxu0 %v242
    %308 = vmatprep.subr.bf16.mxu0 %v245
    %309 = vmatpush1.bf16.msra.mxu0 %v244
    %310 = vmatprep.subr.bf16.mxu0 %v247
    %311 = vmatpush1.bf16.msra.mxu0 %v246
    %312 = vmatprep.subr.bf16.mxu0 %v249
    %313 = vmatpush1.bf16.msra.mxu0 %v248
    %314 = vmatprep.mubr.bf16.mxu0 %v119
    %315 = vmatmul.mubr.bf16.gmra.mrb[0].mxu0 %v118
    %v316 = vpop.f32.mrb[0].mxu0
    %v317 = vadd.f32 %v107, %v316
    %v318 = vpop.f32.mrb[0].mxu0
    %v319 = vadd.f32 %v111, %v318
    %v320 = vpop.f32.mrb[0].mxu0
    %v321 = vadd.f32 %v107, %v320
    %v322 = vpop.f32.mrb[0].mxu0
    %v323 = vadd.f32 %v111, %v322
    %324 = vdwg.mxu0
    %v325 = vmax.f32 %v317, 0.0
    %v326 = vmax.f32 %v319, 0.0
    %v327 = vmax.f32 %v321, 0.0
    %v328 = vmax.f32 %v323, 0.0
    %v329 = vadd.f32 %v325, %v326
    %330 = vadd.xlane.f32.xlu0 %v329
    %v331 = vpop.xlane.xlu0 %330
    %v332 = vadd.f32 %v327, %v328
    %333 = vadd.xlane.f32.xlu0 %v332
    %v334 = vpop.xlane.xlu0 %333
    %v335 = vsel %vm69, 1, 0
    %v336 = vsel %vm70, 1, 0
    %vm337 = vcmp.eq.s32.totalorder %v335, 1
    %vm338 = vcmp.eq.s32.totalorder %v336, 1
    %v339 = vsel %vm337, %v325, 0.0
    %v340 = vsel %vm338, %v326, 0.0
    %v341 = vsel %vm337, %v327, 0.0
    %v342 = vsel %vm338, %v328, 0.0
    %v343 = vadd.f32 %v339, %v340
    %344 = vadd.xlane.f32.xlu0 %v343
    %v345 = vpop.xlane.xlu0 %344
    %v346 = vadd.f32 %v341, %v342
    %347 = vadd.xlane.f32.xlu0 %v346
    %v348 = vpop.xlane.xlu0 %347
    %v349 = vsub.f32 %v331, %v345
    %v350 = vsub.f32 %v334, %v348
    %v351 = vsel %vm337, %v345, %v349
    %v352 = vsel %vm338, %v345, %v349
    %v353 = vsel %vm337, %v348, %v350
    %v354 = vsel %vm338, %v348, %v350
    %v355 = vmul.f32 %v351, 0.0078125
    %v356 = vmul.f32 %v352, 0.0078125
    %v357 = vmul.f32 %v353, 0.0078125
    %v358 = vmul.f32 %v354, 0.0078125
    %v359 = vsub.f32 %v325, %v355
    %v360 = vsub.f32 %v326, %v356
    %v361 = vsub.f32 %v327, %v357
    %v362 = vsub.f32 %v328, %v358
    %v363 = vmul.f32 %v359, %v359
    %v364 = vmul.f32 %v360, %v360
    %v365 = vmul.f32 %v361, %v361
    %v366 = vmul.f32 %v362, %v362
    %v367 = vadd.f32 %v363, %v364
    %368 = vadd.xlane.f32.xlu0 %v367
    %v369 = vpop.xlane.xlu0 %368
    %v370 = vadd.f32 %v365, %v366
    %371 = vadd.xlane.f32.xlu0 %v370
    %v372 = vpop.xlane.xlu0 %371
    %v373 = vsel %vm337, %v363, 0.0
    %v374 = vsel %vm338, %v364, 0.0
    %v375 = vsel %vm337, %v365, 0.0
    %v376 = vsel %vm338, %v366, 0.0
    %v377 = vadd.f32 %v373, %v374
    %378 = vadd.xlane.f32.xlu0 %v377
    %v379 = vpop.xlane.xlu0 %378
    %v380 = vadd.f32 %v375, %v376
    %381 = vadd.xlane.f32.xlu0 %v380
    %v382 = vpop.xlane.xlu0 %381
    %v383 = vsub.f32 %v369, %v379
    %v384 = vsub.f32 %v372, %v382
    %v385 = vmul.f32 %v379, 0.0078125
    %v386 = vmul.f32 %v382, 0.0078125
    %v387 = vadd.f32 %v385, 1e-05
    %v388 = vadd.f32 %v386, 1e-05
    %v389 = vrsqrt.pop %v387
    %v390 = vrsqrt.pop %v388
    %v391 = vmul.f32 %v383, 0.0078125
    %v392 = vmul.f32 %v384, 0.0078125
    %v393 = vadd.f32 %v391, 1e-05
    %v394 = vadd.f32 %v392, 1e-05
    %v395 = vrsqrt.pop %v393
    %v396 = vrsqrt.pop %v394
    %v397 = vsel %vm337, %v389, %v395
    %v398 = vsel %vm338, %v389, %v395
    %v399 = vsel %vm337, %v390, %v396
    %v400 = vsel %vm338, %v390, %v396
    %v401 = vmul.f32 %v359, %v397
    %v402 = vmul.f32 %v360, %v398
    %v403 = vmul.f32 %v361, %v399
    %v404 = vmul.f32 %v362, %v400
    %v405 = vpack.c.bf16 %v403, %v401
    %v406 = vpack.c.bf16 %v404, %v402
    %v407 = vld [vmem:[#allocation4] sm:$0xf]
    %v408 = vld [vmem:[#allocation4 + $0x4] sm:$0xf]
    %v409 = vld [vmem:[#allocation4 + $0x8] sm:$0xf]
    %v410 = vld [vmem:[#allocation4 + $0xc] sm:$0xf]
    %v411 = vld [vmem:[#allocation4 + $0x10] sm:$0xf]
    %v412 = vld [vmem:[#allocation4 + $0x14] sm:$0xf]
    %v413 = vld [vmem:[#allocation4 + $0x18] sm:$0xf]
    %v414 = vld [vmem:[#allocation4 + $0x1c] sm:$0xf]
    %v415 = vld [vmem:[#allocation4 + $0x20] sm:$0xf]
    %v416 = vld [vmem:[#allocation4 + $0x24] sm:$0xf]
    %v417 = vld [vmem:[#allocation4 + $0x28] sm:$0xf]
    %v418 = vld [vmem:[#allocation4 + $0x2c] sm:$0xf]
    %v419 = vld [vmem:[#allocation4 + $0x30] sm:$0xf]
    %v420 = vld [vmem:[#allocation4 + $0x34] sm:$0xf]
    %v421 = vld [vmem:[#allocation4 + $0x38] sm:$0xf]
    %v422 = vld [vmem:[#allocation4 + $0x3c] sm:$0xf]
    %v423 = vld [vmem:[#allocation4 + $0x40] sm:$0xf]
    %v424 = vld [vmem:[#allocation4 + $0x44] sm:$0xf]
    %v425 = vld [vmem:[#allocation4 + $0x48] sm:$0xf]
    %v426 = vld [vmem:[#allocation4 + $0x4c] sm:$0xf]
    %v427 = vld [vmem:[#allocation4 + $0x50] sm:$0xf]
    %v428 = vld [vmem:[#allocation4 + $0x54] sm:$0xf]
    %v429 = vld [vmem:[#allocation4 + $0x58] sm:$0xf]
    %v430 = vld [vmem:[#allocation4 + $0x5c] sm:$0xf]
    %v431 = vld [vmem:[#allocation4 + $0x60] sm:$0xf]
    %v432 = vld [vmem:[#allocation4 + $0x64] sm:$0xf]
    %v433 = vld [vmem:[#allocation4 + $0x68] sm:$0xf]
    %v434 = vld [vmem:[#allocation4 + $0x6c] sm:$0xf]
    %v435 = vld [vmem:[#allocation4 + $0x70] sm:$0xf]
    %v436 = vld [vmem:[#allocation4 + $0x74] sm:$0xf]
    %v437 = vld [vmem:[#allocation4 + $0x78] sm:$0xf]
    %v438 = vld [vmem:[#allocation4 + $0x7c] sm:$0xf]
    %v439 = vlaneseq
    %v440 = vshrl.u32 %v439, 7
    %v441 = vsub.s32 1, %v440
    %v442 = vrot.slane %v64, %v441
    %v475 = vunpack.c.l.b16 %v407
    %v476 = vunpack.c.l.b16 %v408
    %v477 = vunpack.c.l.b16 %v409
    %v478 = vunpack.c.l.b16 %v410
    %v479 = vunpack.c.l.b16 %v411
    %v480 = vunpack.c.l.b16 %v412
    %v481 = vunpack.c.l.b16 %v413
    %v482 = vunpack.c.l.b16 %v414
    %v483 = vunpack.c.l.b16 %v415
    %v484 = vunpack.c.l.b16 %v416
    %v485 = vunpack.c.l.b16 %v417
    %v486 = vunpack.c.l.b16 %v418
    %v487 = vunpack.c.l.b16 %v419
    %v488 = vunpack.c.l.b16 %v420
    %v489 = vunpack.c.l.b16 %v421
    %v490 = vunpack.c.l.b16 %v422
    %v491 = vunpack.c.l.b16 %v423
    %v492 = vunpack.c.l.b16 %v424
    %v493 = vunpack.c.l.b16 %v425
    %v494 = vunpack.c.l.b16 %v426
    %v495 = vunpack.c.l.b16 %v427
    %v496 = vunpack.c.l.b16 %v428
    %v497 = vunpack.c.l.b16 %v429
    %v498 = vunpack.c.l.b16 %v430
    %v499 = vunpack.c.l.b16 %v431
    %v500 = vunpack.c.l.b16 %v432
    %v501 = vunpack.c.l.b16 %v433
    %v502 = vunpack.c.l.b16 %v434
    %v503 = vunpack.c.l.b16 %v435
    %v504 = vunpack.c.l.b16 %v436
    %v505 = vunpack.c.l.b16 %v437
    %v506 = vunpack.c.l.b16 %v438
    %v507 = vpack.c.b16 %v476, %v475
    %v508 = vpack.c.b16 %v478, %v477
    %v509 = vpack.c.b16 %v480, %v479
    %v510 = vpack.c.b16 %v482, %v481
    %v511 = vpack.c.b16 %v484, %v483
    %v512 = vpack.c.b16 %v486, %v485
    %v513 = vpack.c.b16 %v488, %v487
    %v514 = vpack.c.b16 %v490, %v489
    %v515 = vpack.c.b16 %v492, %v491
    %v516 = vpack.c.b16 %v494, %v493
    %v517 = vpack.c.b16 %v496, %v495
    %v518 = vpack.c.b16 %v498, %v497
    %v519 = vpack.c.b16 %v500, %v499
    %v520 = vpack.c.b16 %v502, %v501
    %v521 = vpack.c.b16 %v504, %v503
    %v522 = vpack.c.b16 %v506, %v505
    %539 = vmatprep.subr.bf16.mxu0 0
    %540 = vmatpush1.bf16.msra.mxu0 %v507
    %541 = vmatprep.subr.bf16.mxu0 0
    %542 = vmatpush1.bf16.msra.mxu0 %v508
    %543 = vmatprep.subr.bf16.mxu0 0
    %544 = vmatpush1.bf16.msra.mxu0 %v509
    %545 = vmatprep.subr.bf16.mxu0 0
    %546 = vmatpush1.bf16.msra.mxu0 %v510
    %547 = vmatprep.subr.bf16.mxu0 0
    %548 = vmatpush1.bf16.msra.mxu0 %v511
    %549 = vmatprep.subr.bf16.mxu0 0
    %550 = vmatpush1.bf16.msra.mxu0 %v512
    %551 = vmatprep.subr.bf16.mxu0 0
    %552 = vmatpush1.bf16.msra.mxu0 %v513
    %553 = vmatprep.subr.bf16.mxu0 0
    %554 = vmatpush1.bf16.msra.mxu0 %v514
    %555 = vmatprep.subr.bf16.mxu0 0
    %556 = vmatpush1.bf16.msra.mxu0 %v515
    %557 = vmatprep.subr.bf16.mxu0 0
    %558 = vmatpush1.bf16.msra.mxu0 %v516
    %559 = vmatprep.subr.bf16.mxu0 0
    %560 = vmatpush1.bf16.msra.mxu0 %v517
    %561 = vmatprep.subr.bf16.mxu0 0
    %562 = vmatpush1.bf16.msra.mxu0 %v518
    %563 = vmatprep.subr.bf16.mxu0 0
    %564 = vmatpush1.bf16.msra.mxu0 %v519
    %565 = vmatprep.subr.bf16.mxu0 0
    %566 = vmatpush1.bf16.msra.mxu0 %v520
    %567 = vmatprep.subr.bf16.mxu0 0
    %568 = vmatpush1.bf16.msra.mxu0 %v521
    %569 = vmatprep.subr.bf16.mxu0 0
    %570 = vmatpush1.bf16.msra.mxu0 %v522
    %571 = vmatprep.mubr.bf16.mxu0 %v406
    %572 = vmatmul.mubr.bf16.gmra.mrb[0].mxu0 %v405
    %v573 = vpop.f32.mrb[0].mxu0
    %v574 = vadd.f32 %v442, %v573
    %v575 = vpop.f32.mrb[0].mxu0
    %v576 = vpop.f32.mrb[0].mxu0
    %v577 = vadd.f32 %v442, %v576
    %v578 = vpop.f32.mrb[0].mxu0
    %579 = vdwg.mxu0
    %v580 = vmax.f32 %v574, 0.0
    %v581 = vmax.f32 %v577, 0.0
    %582 = vadd.xlane.f32.xlu0 %v580
    %v583 = vpop.xlane.xlu0 %582
    %584 = vadd.xlane.f32.xlu0 %v581
    %v585 = vpop.xlane.xlu0 %584
    %v586 = vsel %vm71, 1, 0
    %vm587 = vcmp.eq.s32.totalorder %v586, 1
    %v588 = vsel %vm587, %v580, 0.0
    %v589 = vsel %vm587, %v581, 0.0
    %590 = vadd.xlane.f32.xlu0 %v588
    %v591 = vpop.xlane.xlu0 %590
    %592 = vadd.xlane.f32.xlu0 %v589
    %v593 = vpop.xlane.xlu0 %592
    %v594 = vsub.f32 %v583, %v591
    %v595 = vsub.f32 %v585, %v593
    %v596 = vsel %vm587, %v591, %v594
    %v597 = vsel %vm587, %v593, %v595
    %v598 = vmul.f32 %v596, 0.015625
    %v599 = vmul.f32 %v597, 0.015625
    %v600 = vsub.f32 %v580, %v598
    %v601 = vsub.f32 %v581, %v599
    %v602 = vmul.f32 %v600, %v600
    %v603 = vmul.f32 %v601, %v601
    %604 = vadd.xlane.f32.xlu0 %v602
    %v605 = vpop.xlane.xlu0 %604
    %606 = vadd.xlane.f32.xlu0 %v603
    %v607 = vpop.xlane.xlu0 %606
    %v608 = vsel %vm587, %v602, 0.0
    %v609 = vsel %vm587, %v603, 0.0
    %610 = vadd.xlane.f32.xlu0 %v608
    %v611 = vpop.xlane.xlu0 %610
    %612 = vadd.xlane.f32.xlu0 %v609
    %v613 = vpop.xlane.xlu0 %612
    %v614 = vsub.f32 %v605, %v611
    %v615 = vsub.f32 %v607, %v613
    %v616 = vmul.f32 %v611, 0.015625
    %v617 = vmul.f32 %v613, 0.015625
    %v618 = vadd.f32 %v616, 1e-05
    %v619 = vadd.f32 %v617, 1e-05
    %v620 = vrsqrt.pop %v618
    %v621 = vrsqrt.pop %v619
    %v622 = vmul.f32 %v614, 0.015625
    %v623 = vmul.f32 %v615, 0.015625
    %v624 = vadd.f32 %v622, 1e-05
    %v625 = vadd.f32 %v623, 1e-05
    %v626 = vrsqrt.pop %v624
    %v627 = vrsqrt.pop %v625
    %v628 = vsel %vm587, %v620, %v626
    %v629 = vsel %vm587, %v621, %v627
    %v630 = vmul.f32 %v600, %v628
    %v631 = vmul.f32 %v601, %v629
    %v632 = vpack.c.bf16 %v631, %v630
    %v633 = vld [vmem:[#allocation6] sm:$0xf]
    %v634 = vld [vmem:[#allocation6 + $0x4] sm:$0xf]
    %v635 = vld [vmem:[#allocation6 + $0x8] sm:$0xf]
    %v636 = vld [vmem:[#allocation6 + $0xc] sm:$0xf]
    %v637 = vld [vmem:[#allocation6 + $0x10] sm:$0xf]
    %v638 = vld [vmem:[#allocation6 + $0x14] sm:$0xf]
    %v639 = vld [vmem:[#allocation6 + $0x18] sm:$0xf]
    %v640 = vld [vmem:[#allocation6 + $0x1c] sm:$0xf]
    %v641 = vld [vmem:[#allocation6 + $0x20] sm:$0xf]
    %v642 = vld [vmem:[#allocation6 + $0x24] sm:$0xf]
    %v643 = vld [vmem:[#allocation6 + $0x28] sm:$0xf]
    %v644 = vld [vmem:[#allocation6 + $0x2c] sm:$0xf]
    %v645 = vld [vmem:[#allocation6 + $0x30] sm:$0xf]
    %v646 = vld [vmem:[#allocation6 + $0x34] sm:$0xf]
    %v647 = vld [vmem:[#allocation6 + $0x38] sm:$0xf]
    %v648 = vld [vmem:[#allocation6 + $0x3c] sm:$0xf]
    %v649 = vlaneseq
    %v650 = vshrl.u32 %v649, 7
    %v651 = vsub.s32 2, %v650
    %v652 = vrot.slane %v64, %v651
    %v669 = vunpack.c.l.b16 %v633
    %v670 = vunpack.c.l.b16 %v634
    %v671 = vunpack.c.l.b16 %v635
    %v672 = vunpack.c.l.b16 %v636
    %v673 = vunpack.c.l.b16 %v637
    %v674 = vunpack.c.l.b16 %v638
    %v675 = vunpack.c.l.b16 %v639
    %v676 = vunpack.c.l.b16 %v640
    %v677 = vunpack.c.l.b16 %v641
    %v678 = vunpack.c.l.b16 %v642
    %v679 = vunpack.c.l.b16 %v643
    %v680 = vunpack.c.l.b16 %v644
    %v681 = vunpack.c.l.b16 %v645
    %v682 = vunpack.c.l.b16 %v646
    %v683 = vunpack.c.l.b16 %v647
    %v684 = vunpack.c.l.b16 %v648
    %v685 = vpack.c.b16 %v670, %v669
    %v686 = vpack.c.b16 %v672, %v671
    %v687 = vpack.c.b16 %v674, %v673
    %v688 = vpack.c.b16 %v676, %v675
    %v689 = vpack.c.b16 %v678, %v677
    %v690 = vpack.c.b16 %v680, %v679
    %v691 = vpack.c.b16 %v682, %v681
    %v692 = vpack.c.b16 %v684, %v683
    %701 = vmatprep.subr.bf16.mxu0 0
    %702 = vmatpush1.bf16.msra.mxu0 %v685
    %703 = vmatprep.subr.bf16.mxu0 0
    %704 = vmatpush1.bf16.msra.mxu0 %v686
    %705 = vmatprep.subr.bf16.mxu0 0
    %706 = vmatpush1.bf16.msra.mxu0 %v687
    %707 = vmatprep.subr.bf16.mxu0 0
    %708 = vmatpush1.bf16.msra.mxu0 %v688
    %709 = vmatprep.subr.bf16.mxu0 0
    %710 = vmatpush1.bf16.msra.mxu0 %v689
    %711 = vmatprep.subr.bf16.mxu0 0
    %712 = vmatpush1.bf16.msra.mxu0 %v690
    %713 = vmatprep.subr.bf16.mxu0 0
    %714 = vmatpush1.bf16.msra.mxu0 %v691
    %715 = vmatprep.subr.bf16.mxu0 0
    %716 = vmatpush1.bf16.msra.mxu0 %v692
    %717 = vmatprep.subr.bf16.mxu0 0
    %718 = vmatpush1.bf16.msra.mxu0 0
    %719 = vmatprep.subr.bf16.mxu0 0
    %720 = vmatpush1.bf16.msra.mxu0 0
    %721 = vmatprep.subr.bf16.mxu0 0
    %722 = vmatpush1.bf16.msra.mxu0 0
    %723 = vmatprep.subr.bf16.mxu0 0
    %724 = vmatpush1.bf16.msra.mxu0 0
    %725 = vmatprep.subr.bf16.mxu0 0
    %726 = vmatpush1.bf16.msra.mxu0 0
    %727 = vmatprep.subr.bf16.mxu0 0
    %728 = vmatpush1.bf16.msra.mxu0 0
    %729 = vmatprep.subr.bf16.mxu0 0
    %730 = vmatpush1.bf16.msra.mxu0 0
    %731 = vmatprep.subr.bf16.mxu0 0
    %732 = vmatpush1.bf16.msra.mxu0 0
    %733 = vmatprep.mubr.bf16.mxu0 0
    %734 = vmatmul.mubr.bf16.gmra.mrb[0].mxu0 %v632
    %v735 = vpop.f32.mrb[0].mxu0
    %v736 = vadd.f32 %v652, %v735
    %v737 = vpop.f32.mrb[0].mxu0
    %v738 = vpop.f32.mrb[0].mxu0
    %v739 = vadd.f32 %v652, %v738
    %v740 = vpop.f32.mrb[0].mxu0
    %741 = vdwg.mxu0
    %v742 = vxor.u32 %v736, 2147483648
    %v743 = vxor.u32 %v739, 2147483648
    %v744 = vmul.f32 %v742, 1.442695
    %v745 = vpow.pop %v744
    %v746 = vmul.f32 %v743, 1.442695
    %v747 = vpow.pop %v746
    %v748 = vadd.f32 %v745, 1.0
    %v749 = vadd.f32 %v747, 1.0
    %v750 = vrcp.pop %v748
    %v751 = vmul.f32 1.0, %v750
    %v752 = vrcp.pop %v749
    %v753 = vmul.f32 1.0, %v752
    %754 = vst [vmem:[%s5] sm:$0xff] %v751
    %755 = vst [vmem:[%s5 + $0x8] sm:$0xff] %v753
    // Predicated region
    $region34: #{_fused_forward.1} parent=1 // pred_check
      _
    $region35: #{_fused_forward.1} parent=1 // pred_check_branch
      %757 = sbr.rel (0) target = $region37
    $region36: #{_fused_forward.1} parent=1 // pred_region
      _
    $region37: #{_fused_forward.1} parent=1 // pred_fallthru
      _
    // Predicated region
    $region38: #{_fused_forward.1} parent=1 // pred_check
      _
    $region39: #{_fused_forward.1} parent=1 // pred_check_branch
      %759 = sbr.rel (0) target = $region41
    $region40: #{_fused_forward.1} parent=1 // pred_region
      _
    $region41: #{_fused_forward.1} parent=1 // pred_fallthru
      _
    %760 = vsyncpa [#allocation3], 1
    %761 = vsyncpa [#allocation5], 1

</llo_original>
